<compile_context>
chip_gen: v7x
topology: tpu7x:2x2x1
jax: 0.10.0
libtpu: 0.0.40
codegen_flags: <defaults>
</compile_context>

<pallas_src>
import functools

import jax
import jax.numpy as jnp
from jax.experimental import pallas as pl
from jax.experimental.pallas import tpu as pltpu


def _triplet_kernel(a_ref, p_ref, n_ref, out_ref, *scratch,
                    margin, rows_valid, tile_rows, cache_anchor, needs_mask):
    i = pl.program_id(0)
    k = pl.program_id(1)

    @pl.when(k == 0)
    def _():
        out_ref[...] = jnp.zeros_like(out_ref)

    if cache_anchor:
        a_f32_ref, sa_ref = scratch

        @pl.when(k == 0)
        def _():
            a_c = a_ref[...].astype(jnp.float32)            # [tb, D]
            a_f32_ref[...] = a_c
            sa_ref[...] = jnp.sum(a_c * a_c, axis=-1, keepdims=True)

        a = a_f32_ref[...]
        sa = sa_ref[...]
    else:
        a = a_ref[...].astype(jnp.float32)                  # [tb, D]
        sa = jnp.sum(a * a, axis=-1, keepdims=True)

    # TODO(synk): verify via bundle dump that these casts stay fused in vregs;
    # strip-mine D with a fori_loop over lane chunks if they materialize.
    p = p_ref[...].astype(jnp.float32)                      # [tb, D]
    n = n_ref[...].astype(jnp.float32)                      # [tb, D]

    # Fused normalize + cosine similarity: lane reductions + rsqrt on the EUP.
    # TODO(synk): on v7x, offload these axis=-1 reduce adds to the idle MXU
    # (dot against ones[D, 128]) if bundle dumps confirm the VALU is binding.
    sp = jnp.sum(p * p, axis=-1, keepdims=True)
    sn = jnp.sum(n * n, axis=-1, keepdims=True)
    dap = jnp.sum(a * p, axis=-1, keepdims=True)
    dan = jnp.sum(a * n, axis=-1, keepdims=True)

    eps2 = 1e-24   # (F.normalize eps)^2 clamp applied to the squared-norm product
    cos_ap = dap * jax.lax.rsqrt(jnp.maximum(sa * sp, eps2))
    cos_an = dan * jax.lax.rsqrt(jnp.maximum(sa * sn, eps2))

    # (1 - cos_ap) - (1 - cos_an) + margin, relu'd
    losses = jnp.maximum((1.0 - cos_ap) - (1.0 - cos_an) + margin, 0.0)  # [tb, 1]

    if needs_mask:
        # Padded rows live only in the last row tile; mask only there.
        is_last = i == pl.num_programs(0) - 1

        @pl.when(is_last)
        def _():
            row_ids = (jax.lax.broadcasted_iota(jnp.int32, losses.shape, 0)
                       + i * tile_rows)
            masked = jnp.where(row_ids < rows_valid, losses, 0.0)
            out_ref[...] += jnp.sum(masked)

        @pl.when(jnp.logical_not(is_last))
        def _():
            out_ref[...] += jnp.sum(losses)
    else:
        out_ref[...] += jnp.sum(losses)


def _round_up(x, m):
    return ((x + m - 1) // m) * m


def _vmem_budgets():
    """Generation-aware (tile_budget_bytes, vmem_limit_bytes)."""
    try:
        cap = int(pltpu.get_tpu_info().vmem_capacity_bytes)
    except Exception:
        cap = 64 * 1024 * 1024   # conservative (v7x-sized) fallback
    if cap >= 96 * 1024 * 1024:            # v5e / v6e: 128 MiB physical VMEM
        return 48 * 1024 * 1024, 80 * 1024 * 1024
    return 36 * 1024 * 1024, 56 * 1024 * 1024   # v7x: 64 MiB physical VMEM


def _pick_tile_rows(d, itemsize, budget, pack):
    """Largest row tile (multiple of the sublane pack, <= 1024) whose
    double-buffered inputs + f32 anchor cache + f32 temporaries fit `budget`."""
    per_row = 3 * 2 * d * itemsize + 4 * d * 4   # 2x-buffered a/p/n + f32 cache/temps
    tb = budget // per_row
    tb = (tb // pack) * pack
    return int(max(pack, min(1024, tb)))


def triplet_loss(anchor, positive, negative, *, margin=1.0, num_pos=1, num_neg=1,
                 _tile_rows=None):
    """Cosine triplet loss. anchor: [B, ...], positive/negative: [B, K, ...]."""
    assert num_pos == num_neg, 'num_neg must equal num_pos'
    # TODO(synk): only the 'cosine' distance_measure is implemented ('norm' p-dist is not).
    bsz = anchor.shape[0]
    kpos = num_pos

    # Free reshapes only: no tiling / transposing / dtype casts of inputs in HBM.
    a = anchor.reshape(bsz, -1)                               # [B, D]
    p = positive.reshape(bsz, kpos, -1)                       # [B, K, D]
    n = negative.reshape(bsz, kpos, -1)                       # [B, K, D]
    d = a.shape[1]
    assert p.shape == (bsz, kpos, d) and n.shape == (bsz, kpos, d)

    # Lane constraint: when K > 1 the [B, K*D] pos/neg blocks slice D out of the
    # last axis, so D must be a multiple of 128; zero-pad features if not
    # (zeros do not change norms or dot products).
    if kpos > 1 and d % 128 != 0:
        d_pad = _round_up(d, 128)
        a = jnp.pad(a, ((0, 0), (0, d_pad - d)))
        p = jnp.pad(p, ((0, 0), (0, 0), (0, d_pad - d)))
        n = jnp.pad(n, ((0, 0), (0, 0), (0, d_pad - d)))
        d = d_pad

    p = p.reshape(bsz, kpos * d)                              # free (contiguous)
    n = n.reshape(bsz, kpos * d)

    # Row tiling: generation-aware VMEM budget, sublane-pack aligned rows.
    itemsize = a.dtype.itemsize
    pack = max(8, 32 // max(1, itemsize))          # f32: 8, bf16: 16, int8/fp8: 32
    tile_budget, vmem_limit = _vmem_budgets()
    tb = _pick_tile_rows(d, itemsize, tile_budget, pack) if _tile_rows is None \
        else int(_tile_rows)
    if bsz <= tb:
        # Single row tile; keep it sublane-pack aligned when B is big enough.
        # TODO(synk): single-grid-step fast path (loop K in-kernel) for tiny B*K*D.
        tb = _round_up(bsz, pack) if bsz >= pack else bsz
    b_pad = _round_up(bsz, tb)
    if b_pad != bsz:
        a = jnp.pad(a, ((0, b_pad - bsz), (0, 0)))
        p = jnp.pad(p, ((0, b_pad - bsz), (0, 0)))
        n = jnp.pad(n, ((0, b_pad - bsz), (0, 0)))

    num_row_tiles = b_pad // tb
    grid = (num_row_tiles, kpos)
    cache_anchor = kpos > 1
    needs_mask = b_pad != bsz   # load-bearing: padded rows would add `margin` each

    kernel = functools.partial(
        _triplet_kernel,
        margin=float(margin),
        rows_valid=bsz,
        tile_rows=tb,
        cache_anchor=cache_anchor,
        needs_mask=needs_mask)

    scratch_shapes = []
    if cache_anchor:
        scratch_shapes = [pltpu.VMEM((tb, d), jnp.float32),   # cached f32 anchor tile
                          pltpu.VMEM((tb, 1), jnp.float32)]   # cached anchor sq-norm

    partials = pl.pallas_call(
        kernel,
        out_shape=jax.ShapeDtypeStruct((num_row_tiles, 8, 128), jnp.float32),
        grid_spec=pltpu.PrefetchScalarGridSpec(
            num_scalar_prefetch=0,
            grid=grid,
            in_specs=[
                # Anchor tile is re-used across the inner K loop (same block idx).
                pl.BlockSpec((tb, d), lambda i, j: (i, 0)),
                # TODO(synk): sweep pipeline_mode=pl.Buffered(3) on p/n for v5e.
                pl.BlockSpec((tb, d), lambda i, j: (i, j)),
                pl.BlockSpec((tb, d), lambda i, j: (i, j)),
            ],
            # Per-row-tile partial sums, lane-dense; accumulated across K.
            out_specs=pl.BlockSpec((1, 8, 128), lambda i, j: (i, 0, 0)),
            scratch_shapes=scratch_shapes,
        ),
        compiler_params=pltpu.CompilerParams(
            dimension_semantics=("parallel", "arbitrary"),
            vmem_limit_bytes=vmem_limit,
        ),
    )(a, p, n)

    # Final reduce + scale in JAX (keeps the grid megacore-shardable, improves
    # summation numerics for large B).
    return jnp.sum(partials[:, 0, 0]) / (float(num_pos) * float(bsz))


def _reference_triplet_loss(anchor, positive, negative, *, margin, num_pos):
    bsz = anchor.shape[0]
    a = anchor.reshape(bsz, -1)
    p = positive.reshape(bsz, positive.shape[1], -1)
    n = negative.reshape(bsz, negative.shape[1], -1)
    a = a / jnp.maximum(jnp.linalg.norm(a, axis=1, keepdims=True), 1e-12)
    p = p / jnp.maximum(jnp.linalg.norm(p, axis=2, keepdims=True), 1e-12)
    n = n / jnp.maximum(jnp.linalg.norm(n, axis=2, keepdims=True), 1e-12)
    a_rep = jnp.tile(a, (num_pos, 1))
    p_flat = jnp.transpose(p, (1, 0, 2)).reshape(num_pos * bsz, -1)
    n_flat = jnp.transpose(n, (1, 0, 2)).reshape(num_pos * bsz, -1)
    d_ap = 1.0 - jnp.sum(a_rep * p_flat, axis=1)
    d_an = 1.0 - jnp.sum(a_rep * n_flat, axis=1)
    losses = jnp.maximum(d_ap - d_an + margin, 0.0)
    return losses.sum() / num_pos / bsz


if __name__ == "__main__":
    key = jax.random.PRNGKey(0)

    # Test 1: small single-tile case (B=4, K=2, D=256), no padding / no mask.
    k1, k2, k3, k4, k5, k6 = jax.random.split(key, 6)
    bsz, num_pos = 4, 2
    c, h, w = 4, 8, 8   # flattened embedding dim D = 256

    anchor = jax.random.normal(k1, (bsz, c, h, w), dtype=jnp.float32)
    positive = jax.random.normal(k2, (bsz, num_pos, c, h, w), dtype=jnp.float32)
    negative = jax.random.normal(k3, (bsz, num_pos, c, h, w), dtype=jnp.float32)

    loss = triplet_loss(anchor, positive, negative,
                        margin=1.0, num_pos=num_pos, num_neg=num_pos)
    loss = jax.block_until_ready(loss)
    ref = _reference_triplet_loss(anchor, positive, negative,
                                  margin=1.0, num_pos=num_pos)
    assert jnp.allclose(loss, ref, atol=1e-5, rtol=1e-5), (loss, ref)

    # Test 2: multi row-tile case with padded rows + mask (B=20, forced tb=8).
    bsz2, num_pos2 = 20, 2
    anchor2 = jax.random.normal(k4, (bsz2, c, h, w), dtype=jnp.float32)
    positive2 = jax.random.normal(k5, (bsz2, num_pos2, c, h, w), dtype=jnp.float32)
    negative2 = jax.random.normal(k6, (bsz2, num_pos2, c, h, w), dtype=jnp.float32)

    loss2 = triplet_loss(anchor2, positive2, negative2,
                         margin=1.0, num_pos=num_pos2, num_neg=num_pos2,
                         _tile_rows=8)
    loss2 = jax.block_until_ready(loss2)
    ref2 = _reference_triplet_loss(anchor2, positive2, negative2,
                                   margin=1.0, num_pos=num_pos2)
    assert jnp.allclose(loss2, ref2, atol=1e-5, rtol=1e-5), (loss2, ref2)

    print("KERNEL_OK")
</pallas_src>

<mosaic_0001>
module attributes {stable_mosaic.version = 11 : i64} {
  func.func @_triplet_kernel(%arg0: i32, %arg1: i32, %arg2: memref<4x256xf32, #tpu.memory_space<vmem>>, %arg3: memref<4x256xf32, #tpu.memory_space<vmem>>, %arg4: memref<4x256xf32, #tpu.memory_space<vmem>>, %arg5: memref<1x8x128xf32, #tpu.memory_space<vmem>>, %arg6: memref<4x256xf32, #tpu.memory_space<vmem>>, %arg7: memref<4x1xf32, #tpu.memory_space<vmem>>) attributes {dimension_semantics = [#tpu.dimension_semantics<parallel>, #tpu.dimension_semantics<arbitrary>], iteration_bounds = array<i64: 1, 2>, scalar_prefetch = 0 : i64, scratch_operands = 2 : i64, tpu.core_type = #tpu.core_type<tc>, window_params = [{transform_indices = @transform_0, window_bounds = array<i64: 4, 256>}, {transform_indices = @transform_1, window_bounds = array<i64: 4, 256>}, {transform_indices = @transform_2, window_bounds = array<i64: 4, 256>}, {transform_indices = @transform_3, window_bounds = array<i64: 1, 8, 128>}]} {
    %c0_i32 = arith.constant 0 : i32
    %0 = arith.cmpi eq, %arg1, %c0_i32 : i32
    %1 = arith.extui %0 : i1 to i32
    %c0_i32_0 = arith.constant 0 : i32
    %2 = arith.cmpi ne, %1, %c0_i32_0 : i32
    scf.if %2 {
      %cst_26 = arith.constant 0.000000e+00 : f32
      %49 = vector.broadcast %cst_26 : f32 to vector<1x8x128xf32>
      %c0_27 = arith.constant 0 : index
      %c0_28 = arith.constant 0 : index
      %c0_29 = arith.constant 0 : index
      %50 = vector.load %arg5[%c0_27, %c0_28, %c0_29] : memref<1x8x128xf32, #tpu.memory_space<vmem>>, vector<1x8x128xf32>
      tpu.vector_store %arg5[%c0_27, %c0_28, %c0_29], %49 {strides = array<i32>} : memref<1x8x128xf32, #tpu.memory_space<vmem>>, vector<1x8x128xf32>,
    } else {
    }
    %c0_i32_1 = arith.constant 0 : i32
    %3 = arith.cmpi eq, %arg1, %c0_i32_1 : i32
    %4 = arith.extui %3 : i1 to i32
    %c0_i32_2 = arith.constant 0 : i32
    %5 = arith.cmpi ne, %4, %c0_i32_2 : i32
    scf.if %5 {
      %c0_26 = arith.constant 0 : index
      %c0_27 = arith.constant 0 : index
      %49 = vector.load %arg2[%c0_26, %c0_27] : memref<4x256xf32, #tpu.memory_space<vmem>>, vector<4x256xf32>
      %c0_28 = arith.constant 0 : index
      %c0_29 = arith.constant 0 : index
      %50 = vector.load %arg6[%c0_28, %c0_29] : memref<4x256xf32, #tpu.memory_space<vmem>>, vector<4x256xf32>
      tpu.vector_store %arg6[%c0_28, %c0_29], %49 {strides = array<i32>} : memref<4x256xf32, #tpu.memory_space<vmem>>, vector<4x256xf32>,
      %51 = arith.mulf %49, %49 : vector<4x256xf32>
      %cst_30 = arith.constant dense<0.000000e+00> : vector<4xf32>
      %52 = vector.multi_reduction <add>, %51, %cst_30 [1] : vector<4x256xf32> to vector<4xf32>
      %53 = vector.shape_cast %52 : vector<4xf32> to vector<4x1xf32>
      %c0_31 = arith.constant 0 : index
      %c0_32 = arith.constant 0 : index
      %54 = vector.load %arg7[%c0_31, %c0_32] : memref<4x1xf32, #tpu.memory_space<vmem>>, vector<4x1xf32>
      tpu.vector_store %arg7[%c0_31, %c0_32], %53 {strides = array<i32>} : memref<4x1xf32, #tpu.memory_space<vmem>>, vector<4x1xf32>,
    } else {
    }
    %c0 = arith.constant 0 : index
    %c0_3 = arith.constant 0 : index
    %6 = vector.load %arg6[%c0, %c0_3] : memref<4x256xf32, #tpu.memory_space<vmem>>, vector<4x256xf32>
    %c0_4 = arith.constant 0 : index
    %c0_5 = arith.constant 0 : index
    %7 = vector.load %arg7[%c0_4, %c0_5] : memref<4x1xf32, #tpu.memory_space<vmem>>, vector<4x1xf32>
    %c0_6 = arith.constant 0 : index
    %c0_7 = arith.constant 0 : index
    %8 = vector.load %arg3[%c0_6, %c0_7] : memref<4x256xf32, #tpu.memory_space<vmem>>, vector<4x256xf32>
    %c0_8 = arith.constant 0 : index
    %c0_9 = arith.constant 0 : index
    %9 = vector.load %arg4[%c0_8, %c0_9] : memref<4x256xf32, #tpu.memory_space<vmem>>, vector<4x256xf32>
    %10 = arith.mulf %8, %8 : vector<4x256xf32>
    %cst = arith.constant dense<0.000000e+00> : vector<4xf32>
    %11 = vector.multi_reduction <add>, %10, %cst [1] : vector<4x256xf32> to vector<4xf32>
    %12 = vector.shape_cast %11 : vector<4xf32> to vector<4x1xf32>
    %13 = arith.mulf %9, %9 : vector<4x256xf32>
    %cst_10 = arith.constant dense<0.000000e+00> : vector<4xf32>
    %14 = vector.multi_reduction <add>, %13, %cst_10 [1] : vector<4x256xf32> to vector<4xf32>
    %15 = vector.shape_cast %14 : vector<4xf32> to vector<4x1xf32>
    %16 = arith.mulf %6, %8 : vector<4x256xf32>
    %cst_11 = arith.constant dense<0.000000e+00> : vector<4xf32>
    %17 = vector.multi_reduction <add>, %16, %cst_11 [1] : vector<4x256xf32> to vector<4xf32>
    %18 = vector.shape_cast %17 : vector<4xf32> to vector<4x1xf32>
    %19 = arith.mulf %6, %9 : vector<4x256xf32>
    %cst_12 = arith.constant dense<0.000000e+00> : vector<4xf32>
    %20 = vector.multi_reduction <add>, %19, %cst_12 [1] : vector<4x256xf32> to vector<4xf32>
    %21 = vector.shape_cast %20 : vector<4xf32> to vector<4x1xf32>
    %22 = arith.mulf %7, %12 : vector<4x1xf32>
    %cst_13 = arith.constant 1.000000e-24 : f32
    %23 = vector.broadcast %cst_13 : f32 to vector<4x1xf32>
    %24 = arith.maximumf %22, %23 : vector<4x1xf32>
    %25 = math.rsqrt %24 : vector<4x1xf32>
    %26 = arith.mulf %18, %25 : vector<4x1xf32>
    %27 = arith.mulf %7, %15 : vector<4x1xf32>
    %cst_14 = arith.constant 1.000000e-24 : f32
    %28 = vector.broadcast %cst_14 : f32 to vector<4x1xf32>
    %29 = arith.maximumf %27, %28 : vector<4x1xf32>
    %30 = math.rsqrt %29 : vector<4x1xf32>
    %31 = arith.mulf %21, %30 : vector<4x1xf32>
    %cst_15 = arith.constant 1.000000e+00 : f32
    %32 = vector.broadcast %cst_15 : f32 to vector<4x1xf32>
    %33 = arith.subf %32, %26 : vector<4x1xf32>
    %cst_16 = arith.constant 1.000000e+00 : f32
    %34 = vector.broadcast %cst_16 : f32 to vector<4x1xf32>
    %35 = arith.subf %34, %31 : vector<4x1xf32>
    %36 = arith.subf %33, %35 : vector<4x1xf32>
    %cst_17 = arith.constant 1.000000e+00 : f32
    %37 = vector.broadcast %cst_17 : f32 to vector<4x1xf32>
    %38 = arith.addf %36, %37 : vector<4x1xf32>
    %cst_18 = arith.constant 0.000000e+00 : f32
    %39 = vector.broadcast %cst_18 : f32 to vector<4x1xf32>
    %40 = arith.maximumf %38, %39 : vector<4x1xf32>
    %c0_19 = arith.constant 0 : index
    %c0_20 = arith.constant 0 : index
    %c0_21 = arith.constant 0 : index
    %41 = vector.load %arg5[%c0_19, %c0_20, %c0_21] : memref<1x8x128xf32, #tpu.memory_space<vmem>>, vector<1x8x128xf32>
    %42 = vector.shape_cast %40 : vector<4x1xf32> to vector<1x4x1xf32>
    %cst_22 = arith.constant dense<0.000000e+00> : vector<1xf32>
    %43 = vector.multi_reduction <add>, %42, %cst_22 [1, 2] : vector<1x4x1xf32> to vector<1xf32>
    %44 = vector.shape_cast %43 : vector<1xf32> to vector<1x1x1xf32>
    %45 = vector.extract %44[0, 0, 0] : f32 from vector<1x1x1xf32>
    %46 = vector.broadcast %45 : f32 to vector<1x8x128xf32>
    %47 = arith.addf %41, %46 : vector<1x8x128xf32>
    %c0_23 = arith.constant 0 : index
    %c0_24 = arith.constant 0 : index
    %c0_25 = arith.constant 0 : index
    %48 = vector.load %arg5[%c0_23, %c0_24, %c0_25] : memref<1x8x128xf32, #tpu.memory_space<vmem>>, vector<1x8x128xf32>
    tpu.vector_store %arg5[%c0_23, %c0_24, %c0_25], %47 {strides = array<i32>} : memref<1x8x128xf32, #tpu.memory_space<vmem>>, vector<1x8x128xf32>,
    return
  }
  func.func @transform_0(%arg0: i32, %arg1: i32) -> (i32, i32) {
    %c0_i32 = arith.constant 0 : i32
    %c0_i32_0 = arith.constant 0 : i32
    return %arg0, %c0_i32 : i32, i32
  }
  func.func @transform_1(%arg0: i32, %arg1: i32) -> (i32, i32) {
    %c0_i32 = arith.constant 0 : i32
    return %arg0, %arg1 : i32, i32
  }
  func.func @transform_2(%arg0: i32, %arg1: i32) -> (i32, i32) {
    %c0_i32 = arith.constant 0 : i32
    return %arg0, %arg1 : i32, i32
  }
  func.func @transform_3(%arg0: i32, %arg1: i32) -> (i32, i32, i32) {
    %c0_i32 = arith.constant 0 : i32
    %c0_i32_0 = arith.constant 0 : i32
    %c0_i32_1 = arith.constant 0 : i32
    return %arg0, %c0_i32, %c0_i32_0 : i32, i32, i32
  }
}

</mosaic_0001>

<llo_original>
// kernel: tpu_custom_call.1
$region0: #{tpu_custom_call.1}
  #allocation0 [shape = 'u32[]', space=smem, size = 0x4, offset = 0x4, fixed_abs, tag = 'smem constant byte address 0x4 - core index']
  #allocation1 [shape = 'u32[144,128]{1,0:T(1,128)}', space=vmem, size = 0x12000, scoped, tag = 'internal scratch']
  #allocation2 [shape = 'f32[4,256]{1,0:T(4,128)}', space=vmem, size = 0x1000, scoped, tag = 'scratch operand']
  #allocation3 [shape = 'f32[4,1]{1,0:T(4,128)}', space=vmem, size = 0x800, scoped, tag = 'scratch operand']
  %s0 = inlined_call_operand.hbm [shape: f32[4,256], index: 0, kind: input, shape index: {}]
  %s1 = inlined_call_operand.hbm [shape: f32[4,512], index: 1, kind: input, shape index: {}]
  %s2 = inlined_call_operand.hbm [shape: f32[4,512], index: 2, kind: input, shape index: {}]
  %s3 = inlined_call_operand.hbm [shape: f32[1,8,128], index: 3, kind: output, shape index: {}]
  %s4 = sld [smem:[#allocation0]]
  $region61: #{tpu_custom_call.1} parent=0
    _
  %s6 = ssub.s32 1, %s4
  %s7 = scalar_select 0, %s6, %s4
  $region1: #{tpu_custom_call.1} parent=0
    #allocation4 [shape = 'u8[4096]{0}', space=vmem, size = 0x1000, scoped, tag = 'input window, operand 0, single buffered']
    #allocation5 [shape = 's32[2]{0}', space=sflag, size = 0x8, scoped, tag = 'scoped memory for tpu_custom_call.1']
    #allocation6 [shape = 's32[2]{0}', space=sflag, size = 0x8, scoped, tag = 'scoped memory for tpu_custom_call.1']
    #allocation7 [shape = 'u8[8192]{0}', space=vmem, size = 0x2000, scoped, tag = 'input window, operand 1']
    #allocation8 [shape = 's32[2]{0}', space=sflag, size = 0x8, scoped, tag = 'scoped memory for tpu_custom_call.1']
    #allocation9 [shape = 'u8[8192]{0}', space=vmem, size = 0x2000, scoped, tag = 'input window, operand 2']
    #allocation10 [shape = 'u8[4096]{0}', space=vmem, size = 0x1000, scoped, tag = 'output window, operand 0, single buffered']
    %8 = vsyncpa [#allocation5], 0
    %9 = vsyncpa [#allocation8], 0
    %s10 = scalar_lea.sflag [#allocation8], 1
    %11 = vsyncpa %s10, 0
    %12 = vsyncpa [#allocation6], 0
    loop: start=0, step=1, limit=4
    $region2: #{tpu_custom_call.1} parent=1 // loop_pre_header
      _
    $region3: #{tpu_custom_call.1} parent=1 // loop_header
      %s14 = sphi 0, %s18
      %p15 = scmp.ge.s32.totalorder %s14, 4
      %s21 = sphi 0, %s33
      %s22 = sphi 0, %s29
      %s23 = sphi 0, %s21
      %s24 = sphi 0, %s22
      %s25 = sphi 0, %s23
      %s26 = sphi 0, %s24
      %s36 = sphi 0, %s38
      %s39 = sphi 0, %s36
      %s40 = sphi 0, %s39
      %s56 = sphi 0, %s40
      %s64 = sphi 0, %s66
      %s67 = sphi 0, %s64
      %s68 = sphi 0, %s67
      %s84 = sphi 0, %s68
      %s92 = sphi 0, %s94
      %s95 = sphi 0, %s92
      %s96 = sphi 0, %s95
      %s112 = sphi 0, %s96
      %s118 = sphi 0, %s120
      %s121 = sphi 0, %s118
      %s122 = sphi 0, %s121
      %s138 = sphi 0, %s122
    $region4: #{tpu_custom_call.1} parent=1 // loop_header_branch
      %17 = sbr.rel (%p15) target = $region8
    $region5: #{tpu_custom_call.1} parent=1 // loop_body
      %s19 = ssub.s32 %s14, 1
      %s20 = ssub.s32 %s14, 2
      %s27 = sadd.s32 1, %s22
      %p28 = scmp.ge.s32.totalorder %s27, 2
      %s29 = scalar_select %p28, 0, %s27
      %s30 = sadd.s32 1, %s21
      %s31 = scalar_select %p28, %s30, %s21
      %p32 = scmp.ge.s32.totalorder %s31, 1
      %s33 = scalar_select %p32, 0, %s31
      %s34 = ssub.s32 %s21, %s33
      %p35 = scmp.eq.s32.totalorder %s34, 0
      %s37 = sadd.s32 %s36, 1
      %s38 = scalar_select %p35, %s36, %s37
      %p41 = pneg %p35
      %p42 = scmp.eq.s32.totalorder %s14, 1
      %p43 = por %p41, %p42
      %p44 = scmp.ne.s32.totalorder %s36, %s39
      %p45 = scmp.eq.s32.totalorder %s14, 0
      %p46 = por %p44, %p45
      %p47 = scmp.ne.s32.totalorder %s36, %s39
      %p48 = scmp.eq.s32.totalorder %s19, 1
      %p49 = por %p47, %p48
      %p50 = scmp.ne.s32.totalorder %s39, %s40
      %p51 = scmp.eq.s32.totalorder %s19, 0
      %p52 = por %p50, %p51
      %p53 = scmp.ne.s32.totalorder %s39, %s40
      %p54 = scmp.eq.s32.totalorder %s20, 1
      %p55 = por %p53, %p54
      %p57 = scmp.ne.s32.totalorder %s40, %s56
      %p58 = scmp.eq.s32.totalorder %s20, 0
      %p59 = por %p57, %p58
      %s60 = ssub.s32 %s21, %s33
      %s61 = ssub.s32 %s22, %s29
      %s62 = sor.u32 %s60, %s61
      %p63 = scmp.eq.s32.totalorder %s62, 0
      %s65 = sadd.s32 %s64, 1
      %s66 = scalar_select %p63, %s64, %s65
      %p69 = pneg %p63
      %p70 = scmp.eq.s32.totalorder %s14, 1
      %p71 = por %p69, %p70
      %p72 = scmp.ne.s32.totalorder %s64, %s67
      %p73 = scmp.eq.s32.totalorder %s14, 0
      %p74 = por %p72, %p73
      %p75 = scmp.ne.s32.totalorder %s64, %s67
      %p76 = scmp.eq.s32.totalorder %s19, 1
      %p77 = por %p75, %p76
      %p78 = scmp.ne.s32.totalorder %s67, %s68
      %p79 = scmp.eq.s32.totalorder %s19, 0
      %p80 = por %p78, %p79
      %p81 = scmp.ne.s32.totalorder %s67, %s68
      %p82 = scmp.eq.s32.totalorder %s20, 1
      %p83 = por %p81, %p82
      %p85 = scmp.ne.s32.totalorder %s68, %s84
      %p86 = scmp.eq.s32.totalorder %s20, 0
      %p87 = por %p85, %p86
      %s88 = ssub.s32 %s21, %s33
      %s89 = ssub.s32 %s22, %s29
      %s90 = sor.u32 %s88, %s89
      %p91 = scmp.eq.s32.totalorder %s90, 0
      %s93 = sadd.s32 %s92, 1
      %s94 = scalar_select %p91, %s92, %s93
      %p97 = pneg %p91
      %p98 = scmp.eq.s32.totalorder %s14, 1
      %p99 = por %p97, %p98
      %p100 = scmp.ne.s32.totalorder %s92, %s95
      %p101 = scmp.eq.s32.totalorder %s14, 0
      %p102 = por %p100, %p101
      %p103 = scmp.ne.s32.totalorder %s92, %s95
      %p104 = scmp.eq.s32.totalorder %s19, 1
      %p105 = por %p103, %p104
      %p106 = scmp.ne.s32.totalorder %s95, %s96
      %p107 = scmp.eq.s32.totalorder %s19, 0
      %p108 = por %p106, %p107
      %p109 = scmp.ne.s32.totalorder %s95, %s96
      %p110 = scmp.eq.s32.totalorder %s20, 1
      %p111 = por %p109, %p110
      %p113 = scmp.ne.s32.totalorder %s96, %s112
      %p114 = scmp.eq.s32.totalorder %s20, 0
      %p115 = por %p113, %p114
      %s116 = ssub.s32 %s21, %s33
      %p117 = scmp.eq.s32.totalorder %s116, 0
      %s119 = sadd.s32 %s118, 1
      %s120 = scalar_select %p117, %s118, %s119
      %p123 = pneg %p117
      %p124 = scmp.eq.s32.totalorder %s14, 1
      %p125 = por %p123, %p124
      %p126 = scmp.ne.s32.totalorder %s118, %s121
      %p127 = scmp.eq.s32.totalorder %s14, 0
      %p128 = por %p126, %p127
      %p129 = scmp.ne.s32.totalorder %s118, %s121
      %p130 = scmp.eq.s32.totalorder %s19, 1
      %p131 = por %p129, %p130
      %p132 = scmp.ne.s32.totalorder %s121, %s122
      %p133 = scmp.eq.s32.totalorder %s19, 0
      %p134 = por %p132, %p133
      %p135 = scmp.ne.s32.totalorder %s121, %s122
      %p136 = scmp.eq.s32.totalorder %s20, 1
      %p137 = por %p135, %p136
      %p139 = scmp.ne.s32.totalorder %s122, %s138
      %p140 = scmp.eq.s32.totalorder %s20, 0
      %p141 = por %p139, %p140
      %p142 = scmp.le.s32.totalorder 1, %s14
      %p143 = scmp.lt.s32.totalorder %s14, 3
      %p144 = pnand %p142, %p143
      %p145 = pneg %p144
      // Predicated region
      $region9: #{tpu_custom_call.1} parent=5 // pred_check
        _
      $region10: #{tpu_custom_call.1} parent=5 // pred_check_branch
        %147 = sbr.rel (%p144) target = $region12
      $region11: #{tpu_custom_call.1} parent=5 // pred_region
        %s148 = ssub.s32 %s14, 1
        // Predicated region
        $region13: #{tpu_custom_call.1} parent=11 // pred_check
          %p149 = pneg %p52
        $region14: #{tpu_custom_call.1} parent=11 // pred_check_branch
          %151 = sbr.rel (%p149) target = $region16
        $region15: #{tpu_custom_call.1} parent=11 // pred_region
          %s153 = ssub.s32 128, 128
          %154 = vsyncadd [#allocation5], %s153
          %s155 = smul.addr %s23, 2
          %s156 = smul.addr %s155, 64
          %s157 = scalar_lea.hbm %s0, %s156
          %s159 = sshll.u32 [#allocation4], 4
          %s160 = int_to_ptr.vmem [resolvable:$true] %s159
          %162 = dma.hbm_to_vmem [thread:$0]  %s157, 128, %s160, [#allocation5]
        $region16: #{tpu_custom_call.1} parent=11 // pred_fallthru
          _
      $region12: #{tpu_custom_call.1} parent=5 // pred_fallthru
        _
      %p163 = scmp.lt.s32.totalorder %s14, 2
      // Predicated region
      $region17: #{tpu_custom_call.1} parent=5 // pred_check
        %p164 = pneg %p163
      $region18: #{tpu_custom_call.1} parent=5 // pred_check_branch
        %166 = sbr.rel (%p164) target = $region20
      $region19: #{tpu_custom_call.1} parent=5 // pred_region
        // Predicated region
        $region21: #{tpu_custom_call.1} parent=19 // pred_check
          %p167 = pneg %p74
        $region22: #{tpu_custom_call.1} parent=19 // pred_check_branch
          %169 = sbr.rel (%p167) target = $region24
        $region23: #{tpu_custom_call.1} parent=19 // pred_region
          %s170 = sand.u32 %s14, 1
          %s171 = scalar_lea.sflag [#allocation8], %s170
          %s172 = sand.u32 %s64, 1
          %s173 = smul.addr %s172, 8
          %s174 = scalar_lea.vmem [#allocation7], %s173
          %s175 = smul.u32 2, %s22
          %s177 = ssub.s32 128, 128
          %178 = vsyncadd %s171, %s177
          %s179 = smul.addr %s21, 4
          %s180 = sadd.s32 %s175, %s179
          %s181 = smul.addr %s180, 64
          %s182 = scalar_lea.hbm %s1, %s181
          %s184 = sshll.u32 %s174, 4
          %s185 = int_to_ptr.vmem [resolvable:$true] %s184
          %187 = dma.hbm_to_vmem [thread:$0]  %s182, 128, %s185, %s171
        $region24: #{tpu_custom_call.1} parent=19 // pred_fallthru
          _
        // Predicated region
        $region25: #{tpu_custom_call.1} parent=19 // pred_check
          %p188 = pneg %p102
        $region26: #{tpu_custom_call.1} parent=19 // pred_check_branch
          %190 = sbr.rel (%p188) target = $region28
        $region27: #{tpu_custom_call.1} parent=19 // pred_region
          %s191 = sand.u32 %s14, 1
          %s192 = scalar_lea.sflag [#allocation8], %s191
          %s193 = sand.u32 %s92, 1
          %s194 = smul.addr %s193, 8
          %s195 = scalar_lea.vmem [#allocation9], %s194
          %s196 = smul.u32 2, %s22
          %s198 = ssub.s32 128, 128
          %199 = vsyncadd %s192, %s198
          %s200 = smul.addr %s21, 4
          %s201 = sadd.s32 %s196, %s200
          %s202 = smul.addr %s201, 64
          %s203 = scalar_lea.hbm %s2, %s202
          %s205 = sshll.u32 %s195, 4
          %s206 = int_to_ptr.vmem [resolvable:$true] %s205
          %208 = dma.hbm_to_vmem [thread:$0]  %s203, 128, %s206, %s192
        $region28: #{tpu_custom_call.1} parent=19 // pred_fallthru
          _
      $region20: #{tpu_custom_call.1} parent=5 // pred_fallthru
        _
      %p209 = scmp.le.s32.totalorder 1, %s14
      %p210 = scmp.lt.s32.totalorder %s14, 3
      %p211 = pnand %p209, %p210
      %p212 = pneg %p211
      // Predicated region
      $region29: #{tpu_custom_call.1} parent=5 // pred_check
        _
      $region30: #{tpu_custom_call.1} parent=5 // pred_check_branch
        %214 = sbr.rel (%p211) target = $region32
      $region31: #{tpu_custom_call.1} parent=5 // pred_region
        %s215 = ssub.s32 %s14, 1
        // Predicated region
        $region33: #{tpu_custom_call.1} parent=31 // pred_check
          %p216 = pneg %p52
        $region34: #{tpu_custom_call.1} parent=31 // pred_check_branch
          %218 = sbr.rel (%p216) target = $region36
        $region35: #{tpu_custom_call.1} parent=31 // pred_region
          %219 = dma.done [#allocation5], 128
        $region36: #{tpu_custom_call.1} parent=31 // pred_fallthru
          _
        %s220 = sand.u32 %s19, 1
        %s221 = scalar_lea.sflag [#allocation8], %s220
        %s222 = sand.u32 %s67, 1
        %s223 = smul.addr %s222, 8
        %s224 = scalar_lea.vmem [#allocation7], %s223
        // Predicated region
        $region37: #{tpu_custom_call.1} parent=31 // pred_check
          %p225 = pneg %p80
        $region38: #{tpu_custom_call.1} parent=31 // pred_check_branch
          %227 = sbr.rel (%p225) target = $region40
        $region39: #{tpu_custom_call.1} parent=31 // pred_region
          %228 = dma.done %s221, 128
        $region40: #{tpu_custom_call.1} parent=31 // pred_fallthru
          _
        %s229 = sand.u32 %s19, 1
        %s230 = scalar_lea.sflag [#allocation8], %s229
        %s231 = sand.u32 %s95, 1
        %s232 = smul.addr %s231, 8
        %s233 = scalar_lea.vmem [#allocation9], %s232
        // Predicated region
        $region41: #{tpu_custom_call.1} parent=31 // pred_check
          %p234 = pneg %p108
        $region42: #{tpu_custom_call.1} parent=31 // pred_check_branch
          %236 = sbr.rel (%p234) target = $region44
        $region43: #{tpu_custom_call.1} parent=31 // pred_region
          %237 = dma.done %s230, 128
        $region44: #{tpu_custom_call.1} parent=31 // pred_fallthru
          _
        %p238 = pneg %p52
        %p239 = pneg %p49
        %s240 = sand.u32 %s19, 1
        %s241 = scalar_lea.sflag [#allocation8], %s240
        %s242 = sand.u32 %s67, 1
        %s243 = smul.addr %s242, 8
        %s244 = scalar_lea.vmem [#allocation7], %s243
        %p245 = pneg %p80
        %p246 = pneg %p77
        %s247 = sand.u32 %s19, 1
        %s248 = scalar_lea.sflag [#allocation8], %s247
        %s249 = sand.u32 %s95, 1
        %s250 = smul.addr %s249, 8
        %s251 = scalar_lea.vmem [#allocation9], %s250
        %p252 = pneg %p108
        %p253 = pneg %p105
        %p254 = pneg %p134
        %p255 = pneg %p131
        %s256 = smul.u32 2, %s24
        %s257 = smul.u32 2, %s24
        %p258 = scmp.eq.s32.totalorder %s24, 0
        // Predicated region
        $region45: #{tpu_custom_call.1} parent=31 // pred_check
          %p259 = pneg %p258
        $region46: #{tpu_custom_call.1} parent=31 // pred_check_branch
          %261 = sbr.rel (%p259) target = $region48
        $region47: #{tpu_custom_call.1} parent=31 // pred_region
          %262 = vst [vmem:[#allocation10] sm:$0xff] 0.0
          %v263 = vld [vmem:[#allocation4] sm:$0xff]
          %264 = vst [vmem:[#allocation2] sm:$0xff] %v263
          %v265 = vmul.f32 %v263, %v263
          %v267 = vcombine.high %v265, %v265
          %vm269 = vcmask 1043456
          %v270 = vsel %vm269, %v265, 0.0
          %v271 = vsel %vm269, %v267, 0.0
          %v272 = vadd.f32 %v270, %v271
          %273 = vadd.xlane.f32.xlu0 %v272
          %v274 = vpop.xlane.xlu0 %273
          %vm275 = vcmask 3072
          %276 = vst.msk [vmem:[#allocation3] sm:$0xf] %vm275, %v274
        $region48: #{tpu_custom_call.1} parent=31 // pred_fallthru
          _
        %v277 = vld [vmem:[#allocation2] sm:$0xff]
        %v278 = vld [vmem:[#allocation3] sm:$0xf]
        %v279 = vld [vmem:[%s224] sm:$0xff]
        %v280 = vld [vmem:[%s233] sm:$0xff]
        %v281 = vmul.f32 %v279, %v279
        %v283 = vcombine.high %v281, %v281
        %vm285 = vcmask 1043456
        %v286 = vsel %vm285, %v281, 0.0
        %v287 = vsel %vm285, %v283, 0.0
        %v288 = vadd.f32 %v286, %v287
        %289 = vadd.xlane.f32.xlu0 %v288
        %v290 = vpop.xlane.xlu0 %289
        %v291 = vmul.f32 %v280, %v280
        %v293 = vcombine.high %v291, %v291
        %v295 = vsel %vm285, %v291, 0.0
        %v296 = vsel %vm285, %v293, 0.0
        %v297 = vadd.f32 %v295, %v296
        %298 = vadd.xlane.f32.xlu0 %v297
        %v299 = vpop.xlane.xlu0 %298
        %v300 = vmul.f32 %v277, %v279
        %v302 = vcombine.high %v300, %v300
        %v304 = vsel %vm285, %v300, 0.0
        %v305 = vsel %vm285, %v302, 0.0
        %v306 = vadd.f32 %v304, %v305
        %307 = vadd.xlane.f32.xlu0 %v306
        %v308 = vpop.xlane.xlu0 %307
        %v309 = vmul.f32 %v277, %v280
        %v311 = vcombine.high %v309, %v309
        %v313 = vsel %vm285, %v309, 0.0
        %v314 = vsel %vm285, %v311, 0.0
        %v315 = vadd.f32 %v313, %v314
        %316 = vadd.xlane.f32.xlu0 %v315
        %v317 = vpop.xlane.xlu0 %316
        %v318 = vmul.f32 %v278, %v290
        %v319 = vmax.f32 %v318, 1e-24
        %v320 = vrsqrt.pop %v319
        %v321 = vmul.f32 %v308, %v320
        %v322 = vmul.f32 %v278, %v299
        %v323 = vmax.f32 %v322, 1e-24
        %v324 = vrsqrt.pop %v323
        %v325 = vmul.f32 %v317, %v324
        %v326 = vsub.f32 1.0, %v321
        %v327 = vsub.f32 1.0, %v325
        %v328 = vsub.f32 %v326, %v327
        %v329 = vadd.f32 %v328, 1.0
        %v330 = vmax.f32 %v329, 0.0
        %v331 = vld [vmem:[#allocation10] sm:$0xff]
        %vm332 = vcmask 3072
        %v333 = vsel %vm332, %v330, 0.0
        %334 = vadd.xlane.f32.xlu0 %v333
        %v335 = vpop.xlane.xlu0 %334
        %v336 = vrot.slane %v335, 4
        %v337 = vadd.f32 %v335, %v336
        %v338 = vrot.slane %v337, 2
        %v339 = vadd.f32 %v337, %v338
        %v340 = vrot.slane %v339, 1
        %v341 = vadd.f32 %v339, %v340
        %s342 = vtos %v341
        %v343 = vstv %s342
        %v344 = vadd.f32 %v331, %v343
        %345 = vst [vmem:[#allocation10] sm:$0xff] %v344
        // Predicated region
        $region49: #{tpu_custom_call.1} parent=31 // pred_check
          %p346 = pneg %p131
        $region50: #{tpu_custom_call.1} parent=31 // pred_check_branch
          %348 = sbr.rel (%p346) target = $region52
        $region51: #{tpu_custom_call.1} parent=31 // pred_region
          %s350 = ssub.s32 128, 128
          %351 = vsyncadd [#allocation6], %s350
          %s352 = smul.addr %s23, 128
          %s353 = scalar_lea.hbm %s3, %s352
          %s355 = sshll.u32 [#allocation10], 4
          %s356 = int_to_ptr.vmem [resolvable:$true] %s355
          %358 = dma.vmem_to_hbm [thread:$0]  %s356, 128, %s353, [#allocation6]
        $region52: #{tpu_custom_call.1} parent=31 // pred_fallthru
          _
        // Predicated region
        $region53: #{tpu_custom_call.1} parent=31 // pred_check
          %p359 = pneg %p131
        $region54: #{tpu_custom_call.1} parent=31 // pred_check_branch
          %361 = sbr.rel (%p359) target = $region56
        $region55: #{tpu_custom_call.1} parent=31 // pred_region
          %362 = dma.done [#allocation6], 128
        $region56: #{tpu_custom_call.1} parent=31 // pred_fallthru
          _
      $region32: #{tpu_custom_call.1} parent=5 // pred_fallthru
        _
      %p363 = scmp.le.s32.totalorder 2, %s14
      // Predicated region
      $region57: #{tpu_custom_call.1} parent=5 // pred_check
        %p364 = pneg %p363
      $region58: #{tpu_custom_call.1} parent=5 // pred_check_branch
        %366 = sbr.rel (%p364) target = $region60
      $region59: #{tpu_custom_call.1} parent=5 // pred_region
        %s367 = ssub.s32 %s14, 2
      $region60: #{tpu_custom_call.1} parent=5 // pred_fallthru
        _
    $region6: #{tpu_custom_call.1} parent=1 // loop_footer
      %s18 = sadd.s32 1, %s14
    $region7: #{tpu_custom_call.1} parent=1 // loop_footer_branch
      %13 = sbr.rel target = $region3
    $region8: #{tpu_custom_call.1} parent=1 // loop_exit
      _
    %368 = vsyncpa [#allocation5], 1
    %s369 = scalar_lea.sflag [#allocation5], 1
    %370 = vsyncpa %s369, 1
    %371 = vsyncpa [#allocation8], 1
    %s372 = scalar_lea.sflag [#allocation8], 1
    %373 = vsyncpa %s372, 1
    %374 = vsyncpa [#allocation6], 1
    %s375 = scalar_lea.sflag [#allocation6], 1
    %376 = vsyncpa %s375, 1

</llo_original>
